<compile_context>
chip_gen: v6e
topology: v6e:2x2x1
jax: 0.10.0
libtpu: 0.0.40
codegen_flags: <defaults>
</compile_context>

<pallas_src>
import functools

import jax
import jax.numpy as jnp
from jax.experimental import pallas as pl
from jax.experimental.pallas import tpu as pltpu


_TRANSCENDENTAL_NONLIN = ("cos", "tanh", "softplus", "sigmoid")


def _apply_nonlin(x, nonlinearity):
    if nonlinearity is None:
        return x
    elif nonlinearity == "cos":
        return jnp.cos(x)
    elif nonlinearity == "tanh":
        return jnp.tanh(x)
    elif nonlinearity == "softplus":
        # torch.nn.Softplus default: beta=1, threshold=20
        return jnp.where(x > 20.0, x, jnp.log1p(jnp.exp(jnp.minimum(x, 20.0))))
    elif nonlinearity == "lrelu":
        # torch.nn.LeakyReLU default negative_slope=0.01
        return jnp.where(x >= 0.0, x, 0.01 * x)
    elif nonlinearity == "sigmoid":
        return jax.nn.sigmoid(x)
    else:
        raise ValueError(f"unknown nonlinearity {nonlinearity!r}")


# ----------------------------- kernels -----------------------------


def _resident_kernel(x_ref, w_ref, *rest, nonlinearity, use_bias):
    # x_ref: (tm, K), w_ref: (K, pad_out) resident, optional b_ref: (1, pad_out),
    # o_ref: (tm, pad_out).  Single dot + fused epilogue; no K loop, no accumulator.
    if use_bias:
        b_ref, o_ref = rest
    else:
        (o_ref,) = rest
    acc = jnp.dot(x_ref[...], w_ref[...], preferred_element_type=jnp.float32)
    if use_bias:
        acc = acc + b_ref[...].astype(jnp.float32)
    o_ref[...] = _apply_nonlin(acc, nonlinearity).astype(o_ref.dtype)


def _tiled_kernel(x_ref, w_ref, *rest, nonlinearity, use_bias):
    # x_ref: (tm, tk), w_ref: (tk, tn) pre-transposed, optional b_ref: (1, tn),
    # o_ref: (tm, tn), acc_ref: (tm, tn) f32 scratch persisting across the K axis.
    if use_bias:
        b_ref, o_ref, acc_ref = rest
    else:
        o_ref, acc_ref = rest

    k = pl.program_id(2)

    @pl.when(k == 0)
    def _():
        acc_ref[...] = jnp.zeros_like(acc_ref)

    acc_ref[...] += jnp.dot(x_ref[...], w_ref[...], preferred_element_type=jnp.float32)

    @pl.when(k == pl.num_programs(2) - 1)
    def _():
        acc = acc_ref[...]
        if use_bias:
            acc = acc + b_ref[...].astype(jnp.float32)
        o_ref[...] = _apply_nonlin(acc, nonlinearity).astype(o_ref.dtype)


# ----------------------------- tiling helpers -----------------------------


def _round_up(v, m):
    return ((v + m - 1) // m) * m


def _choose_tm(n):
    # Largest sublane-aligned M tile whose ragged-edge waste stays under ~20%.
    for tm in (512, 256, 128, 64, 32, 16, 8):
        waste = -(-n // tm) * tm - n
        if waste <= n // 5:
            return tm
    return min(512, _round_up(n, 8))


def _choose_k(in_ch):
    # Returns (padded K, K tile).  Prefer 512/256 tiles; bump an odd-128 K up to a 256
    # multiple when the extra MACs are <25% (matches v6e/v7x MXU contraction depth).
    pad_k = _round_up(in_ch, 128)
    if pad_k % 512 == 0:
        return pad_k, 512
    if pad_k % 256 == 0:
        return pad_k, 256
    pad256 = _round_up(pad_k, 256)
    if pad256 - in_ch <= 0.25 * in_ch:
        return pad256, 256
    return pad_k, 128


def _vmem_limit(footprint_bytes):
    # Footprint already counts double buffering; add compiler headroom and cap at
    # 48 MiB so the budget is safe on v7x (64 MiB VMEM) as well as v5e/v6e (128 MiB).
    return int(min(48 * 1024 * 1024,
                   max(footprint_bytes + 8 * 1024 * 1024, 16 * 1024 * 1024)))


# ----------------------------- wrapper -----------------------------


def linear_nonlin(x, weight, bias=None, nonlinearity=None, *,
                  compute_dtype=None, _force_tiled=False):
    """Forward of Linear_nonlin.

    x:       any shape flattening to (-1, in_ch)
    weight:  (out_ch, in_ch) -- PyTorch nn.Linear convention
    bias:    (out_ch,) or None
    compute_dtype: optionally cast x/W for the MXU (e.g. jnp.bfloat16); changes numerics.
    returns: (N, out_ch)
    """
    out_ch, in_ch = weight.shape
    x2d = x.reshape(-1, in_ch)
    n = x2d.shape[0]
    use_bias = bias is not None
    out_dtype = x.dtype

    # One-time transpose to (K, N): kernel runs a plain (tm,tk)x(tk,tn) MXU contraction.
    w_t = weight.T
    if compute_dtype is not None:
        x2d = x2d.astype(compute_dtype)
        w_t = w_t.astype(compute_dtype)

    # Pad out_ch to a 128 multiple so output stores are lane-dense (unmasked vst).
    pad_out = _round_up(out_ch, 128)
    if pad_out != out_ch:
        w_t = jnp.pad(w_t, ((0, 0), (0, pad_out - out_ch)))
    b2d = None
    if use_bias:
        b2d = bias if pad_out == out_ch else jnp.pad(bias, (0, pad_out - out_ch))
        b2d = b2d.reshape(1, pad_out)

    x_item = x2d.dtype.itemsize
    w_item = w_t.dtype.itemsize
    o_item = jnp.dtype(out_dtype).itemsize

    cost = pl.CostEstimate(
        flops=2 * n * pad_out * in_ch + (n * pad_out if use_bias else 0),
        transcendentals=n * pad_out if nonlinearity in _TRANSCENDENTAL_NONLIN else 0,
        bytes_accessed=(n * in_ch * x_item + in_ch * pad_out * w_item
                        + (pad_out * 4 if use_bias else 0) + n * pad_out * o_item),
    )
    kernel_kwargs = dict(nonlinearity=nonlinearity, use_bias=use_bias)

    # ---------------- resident-weight fast path ----------------
    resident_w_bytes = in_ch * pad_out * w_item
    if (not _force_tiled) and resident_w_bytes <= 6 * 1024 * 1024 and pad_out <= 2048:
        tm = _choose_tm(n)
        if x_item < 4:
            tm = max(16, _round_up(tm, 16))   # sub-32-bit sublane packing
        # Keep double-buffered x/out tiles within ~32 MiB (weight counted separately).
        while tm > 8 and 2 * tm * (in_ch * x_item + pad_out * o_item) > 32 * 1024 * 1024:
            tm = max(8, (tm // 2) // 8 * 8)

        in_specs = [
            pl.BlockSpec((tm, in_ch), lambda i: (i, 0)),
            pl.BlockSpec((in_ch, pad_out), lambda i: (0, 0)),   # resident weight
        ]
        inputs = [x2d, w_t]
        if use_bias:
            in_specs.append(pl.BlockSpec((1, pad_out), lambda i: (0, 0)))
            inputs.append(b2d)

        footprint = (2 * tm * in_ch * x_item + 2 * in_ch * pad_out * w_item
                     + 2 * tm * pad_out * o_item
                     + (2 * pad_out * b2d.dtype.itemsize if use_bias else 0))

        out_p = pl.pallas_call(
            functools.partial(_resident_kernel, **kernel_kwargs),
            out_shape=jax.ShapeDtypeStruct((n, pad_out), out_dtype),
            grid_spec=pltpu.PrefetchScalarGridSpec(
                num_scalar_prefetch=0,
                grid=(pl.cdiv(n, tm),),
                in_specs=in_specs,
                out_specs=pl.BlockSpec((tm, pad_out), lambda i: (i, 0)),
            ),
            compiler_params=pltpu.CompilerParams(
                dimension_semantics=("parallel",),
                vmem_limit_bytes=_vmem_limit(footprint),
            ),
            cost_estimate=cost,
        )(*inputs)
    else:
        # ---------------- general (M, N, K)-tiled path ----------------
        pad_k, tk = _choose_k(in_ch)
        if pad_k != in_ch:
            # K padding is required for contraction correctness with a K grid axis.
            x2d = jnp.pad(x2d, ((0, 0), (0, pad_k - in_ch)))
            w_t = jnp.pad(w_t, ((0, pad_k - in_ch), (0, 0)))

        tn = 512 if pad_out % 512 == 0 else (256 if pad_out % 256 == 0 else 128)
        tm = _choose_tm(n)
        if x_item < 4:
            tm = max(16, _round_up(tm, 16))

        in_specs = [
            pl.BlockSpec((tm, tk), lambda i, j, k: (i, k)),
            pl.BlockSpec((tk, tn), lambda i, j, k: (k, j)),
        ]
        inputs = [x2d, w_t]
        if use_bias:
            in_specs.append(pl.BlockSpec((1, tn), lambda i, j, k: (0, j)))
            inputs.append(b2d)

        footprint = (2 * tm * tk * x_item + 2 * tk * tn * w_item
                     + 2 * tm * tn * o_item + tm * tn * 4
                     + (2 * tn * b2d.dtype.itemsize if use_bias else 0))

        out_p = pl.pallas_call(
            functools.partial(_tiled_kernel, **kernel_kwargs),
            out_shape=jax.ShapeDtypeStruct((n, pad_out), out_dtype),
            grid_spec=pltpu.PrefetchScalarGridSpec(
                num_scalar_prefetch=0,
                grid=(pl.cdiv(n, tm), pad_out // tn, pad_k // tk),
                in_specs=in_specs,
                out_specs=pl.BlockSpec((tm, tn), lambda i, j, k: (i, j)),
                scratch_shapes=[pltpu.VMEM((tm, tn), jnp.float32)],
            ),
            compiler_params=pltpu.CompilerParams(
                dimension_semantics=("parallel", "parallel", "arbitrary"),
                vmem_limit_bytes=_vmem_limit(footprint),
            ),
            cost_estimate=cost,
        )(*inputs)

    if pad_out != out_ch:
        out_p = out_p[:, :out_ch]
    return out_p


# ----------------------------- reference & test -----------------------------


def _reference(x, weight, bias, nonlinearity):
    in_ch = weight.shape[1]
    y = x.reshape(-1, in_ch) @ weight.T
    if bias is not None:
        y = y + bias
    return _apply_nonlin(y, nonlinearity)


if __name__ == "__main__":
    key = jax.random.PRNGKey(0)
    in_ch, out_ch = 32, 64
    batch, seq = 2, 8          # x: (2, 8, 32) -> flattened to (16, 32)

    k1, k2, k3, k4 = jax.random.split(key, 4)
    x = jax.random.normal(k1, (batch, seq, in_ch), dtype=jnp.float32)
    # deterministic param init mimicking nn.Linear's uniform(-1/sqrt(in_ch), 1/sqrt(in_ch))
    bound = 1.0 / jnp.sqrt(jnp.float32(in_ch))
    weight = jax.random.uniform(k2, (out_ch, in_ch), jnp.float32, -bound, bound)
    bias = jax.random.uniform(k3, (out_ch,), jnp.float32, -bound, bound)

    # fast (resident-weight) path, all nonlinearities
    for nl in [None, "cos", "tanh", "softplus", "lrelu", "sigmoid"]:
        out = jax.block_until_ready(linear_nonlin(x, weight, bias, nonlinearity=nl))
        ref = _reference(x, weight, bias, nl)
        assert out.shape == (batch * seq, out_ch), out.shape
        assert jnp.allclose(out, ref, atol=1e-5, rtol=1e-5), f"mismatch for {nl}"

    # bias=None path (bias operand dropped entirely)
    out_nb = jax.block_until_ready(linear_nonlin(x, weight, None, nonlinearity="tanh"))
    assert jnp.allclose(out_nb, _reference(x, weight, None, "tanh"), atol=1e-5, rtol=1e-5)

    # ragged M (row count not a multiple of the M tile): exercises pl.cdiv clipping
    x_ragged = jax.random.normal(k4, (21, in_ch), dtype=jnp.float32)
    out_rg = jax.block_until_ready(
        linear_nonlin(x_ragged, weight, bias, nonlinearity="lrelu"))
    assert out_rg.shape == (21, out_ch)
    assert jnp.allclose(out_rg, _reference(x_ragged, weight, bias, "lrelu"),
                        atol=1e-5, rtol=1e-5)

    # general (M, N, K)-tiled path with f32 VMEM accumulator
    out_t = jax.block_until_ready(
        linear_nonlin(x, weight, bias, nonlinearity="softplus", _force_tiled=True))
    assert jnp.allclose(out_t, _reference(x, weight, bias, "softplus"),
                        atol=1e-5, rtol=1e-5)

    print("KERNEL_OK")
</pallas_src>

<mosaic_0001>
module attributes {stable_mosaic.version = 11 : i64} {
  func.func @_resident_kernel(%arg0: i32, %arg1: memref<16x32xf32, #tpu.memory_space<vmem>>, %arg2: memref<32x128xf32, #tpu.memory_space<vmem>>, %arg3: memref<1x128xf32, #tpu.memory_space<vmem>>, %arg4: memref<16x128xf32, #tpu.memory_space<vmem>>) attributes {dimension_semantics = [#tpu.dimension_semantics<parallel>], iteration_bounds = array<i64: 1>, scalar_prefetch = 0 : i64, scratch_operands = 0 : i64, tpu.core_type = #tpu.core_type<tc>, window_params = [{transform_indices = @transform_0, window_bounds = array<i64: 16, 32>}, {pipeline_mode = #tpu.pipeline_mode<synchronous>, transform_indices = @transform_1, window_bounds = array<i64: 32, 128>}, {pipeline_mode = #tpu.pipeline_mode<synchronous>, transform_indices = @transform_2, window_bounds = array<i64: 1, 128>}, {transform_indices = @transform_3, window_bounds = array<i64: 16, 128>}]} {
    %c0 = arith.constant 0 : index
    %c0_0 = arith.constant 0 : index
    %0 = vector.load %arg1[%c0, %c0_0] : memref<16x32xf32, #tpu.memory_space<vmem>>, vector<16x32xf32>
    %c0_1 = arith.constant 0 : index
    %c0_2 = arith.constant 0 : index
    %1 = vector.load %arg2[%c0_1, %c0_2] : memref<32x128xf32, #tpu.memory_space<vmem>>, vector<32x128xf32>
    %cst = arith.constant dense<0.000000e+00> : vector<16x128xf32>
    %2 = tpu.matmul %0, %1, %cst {dimension_numbers = #tpu.dot_dimension_numbers<[1], [0], [0], [1], [0, 0, 1, 1], [], []>} : vector<16x32xf32>, vector<32x128xf32>, vector<16x128xf32> -> vector<16x128xf32>
    %c0_3 = arith.constant 0 : index
    %c0_4 = arith.constant 0 : index
    %3 = vector.load %arg3[%c0_3, %c0_4] : memref<1x128xf32, #tpu.memory_space<vmem>>, vector<1x128xf32>
    %4 = vector.broadcast %3 : vector<1x128xf32> to vector<16x128xf32>
    %5 = arith.addf %2, %4 : vector<16x128xf32>
    %c0_5 = arith.constant 0 : index
    %c0_6 = arith.constant 0 : index
    %6 = vector.load %arg4[%c0_5, %c0_6] : memref<16x128xf32, #tpu.memory_space<vmem>>, vector<16x128xf32>
    tpu.vector_store %arg4[%c0_5, %c0_6], %5 {strides = array<i32>} : memref<16x128xf32, #tpu.memory_space<vmem>>, vector<16x128xf32>,
    return
  }
  func.func @transform_0(%arg0: i32) -> (i32, i32) {
    %c0_i32 = arith.constant 0 : i32
    %c0_i32_0 = arith.constant 0 : i32
    return %arg0, %c0_i32 : i32, i32
  }
  func.func @transform_1(%arg0: i32) -> (i32, i32) {
    %c0_i32 = arith.constant 0 : i32
    %c0_i32_0 = arith.constant 0 : i32
    %c0_i32_1 = arith.constant 0 : i32
    return %c0_i32, %c0_i32_0 : i32, i32
  }
  func.func @transform_2(%arg0: i32) -> (i32, i32) {
    %c0_i32 = arith.constant 0 : i32
    %c0_i32_0 = arith.constant 0 : i32
    %c0_i32_1 = arith.constant 0 : i32
    return %c0_i32, %c0_i32_0 : i32, i32
  }
  func.func @transform_3(%arg0: i32) -> (i32, i32) {
    %c0_i32 = arith.constant 0 : i32
    %c0_i32_0 = arith.constant 0 : i32
    return %arg0, %c0_i32 : i32, i32
  }
}

</mosaic_0001>

<llo_original>
// kernel: tpu_custom_call.1
$region0: #{tpu_custom_call.1}
  #allocation0 [shape = 'u32[]', space=smem, size = 0x4, offset = 0x4, fixed_abs, tag = 'smem constant byte address 0x4 - core index']
  #allocation1 [shape = 'u32[144,128]{1,0:T(1,128)}', space=vmem, size = 0x12000, scoped, tag = 'internal scratch']
  %s0 = inlined_call_operand.hbm [shape: f32[16,32], index: 0, kind: input, shape index: {}]
  %s1 = inlined_call_operand.hbm [shape: f32[32,128], index: 1, kind: input, shape index: {}]
  %s2 = inlined_call_operand.vmem [shape: f32[1,128], index: 2, kind: input, shape index: {}]
  %s3 = inlined_call_operand.hbm [shape: f32[16,128], index: 3, kind: output, shape index: {}]
  %s4 = sld [smem:[#allocation0]]
  $region30: #{tpu_custom_call.1} parent=0
    _
  %s6 = ssub.s32 1, %s4
  %s7 = scalar_select 0, %s6, %s4
  $region1: #{tpu_custom_call.1} parent=0
    #allocation2 [shape = 'u8[8192]{0}', space=vmem, size = 0x2000, scoped, tag = 'input window, operand 0, single buffered']
    #allocation3 [shape = 's32[1]{0}', space=sflag, size = 0x4, scoped, tag = 'scoped memory for tpu_custom_call.1']
    #allocation4 [shape = 's32[1]{0}', space=sflag, size = 0x4, scoped, tag = 'scoped memory for tpu_custom_call.1']
    #allocation5 [shape = 'u8[16384]{0}', space=vmem, size = 0x4000, scoped, tag = 'input window, operand 1, single buffered']
    #allocation6 [shape = 's32[1]{0}', space=sflag, size = 0x4, scoped, tag = 'scoped memory for tpu_custom_call.1']
    #allocation7 [shape = 'u8[8192]{0}', space=vmem, size = 0x2000, scoped, tag = 'output window, operand 0, single buffered']
    %8 = vsyncpa [#allocation3], 0
    %9 = vsyncpa [#allocation6], 0
    %10 = vsyncpa [#allocation4], 0
    // Predicated region
    $region2: #{tpu_custom_call.1} parent=1 // pred_check
      _
    $region3: #{tpu_custom_call.1} parent=1 // pred_check_branch
      %12 = sbr.rel (0) target = $region5
    $region4: #{tpu_custom_call.1} parent=1 // pred_region
      %s14 = ssub.s32 256, 256
      %15 = vsyncadd [#allocation3], %s14
      %s16 = sshll.u32 [#allocation2], 4
      %s17 = int_to_ptr.vmem [resolvable:$true] %s16
      %22 = dma.hbm_to_vmem [thread:$0]  %s0, 256, %s17, [#allocation3], 128, 128, 8
    $region5: #{tpu_custom_call.1} parent=1 // pred_fallthru
      _
    // Predicated region
    $region6: #{tpu_custom_call.1} parent=1 // pred_check
      _
    $region7: #{tpu_custom_call.1} parent=1 // pred_check_branch
      %24 = sbr.rel (0) target = $region9
    $region8: #{tpu_custom_call.1} parent=1 // pred_region
      %s26 = ssub.s32 512, 512
      %27 = vsyncadd [#allocation6], %s26
      %s28 = sshll.u32 [#allocation5], 4
      %s29 = int_to_ptr.vmem [resolvable:$true] %s28
      %34 = dma.hbm_to_vmem [thread:$0]  %s1, 512, %s29, [#allocation6], 128, 128, 8
    $region9: #{tpu_custom_call.1} parent=1 // pred_fallthru
      _
    // Predicated region
    $region10: #{tpu_custom_call.1} parent=1 // pred_check
      _
    $region11: #{tpu_custom_call.1} parent=1 // pred_check_branch
      %36 = sbr.rel (0) target = $region13
    $region12: #{tpu_custom_call.1} parent=1 // pred_region
      _
    $region13: #{tpu_custom_call.1} parent=1 // pred_fallthru
      _
    // Predicated region
    $region14: #{tpu_custom_call.1} parent=1 // pred_check
      _
    $region15: #{tpu_custom_call.1} parent=1 // pred_check_branch
      %38 = sbr.rel (0) target = $region17
    $region16: #{tpu_custom_call.1} parent=1 // pred_region
      %39 = dma.done [#allocation3], 256
    $region17: #{tpu_custom_call.1} parent=1 // pred_fallthru
      _
    // Predicated region
    $region18: #{tpu_custom_call.1} parent=1 // pred_check
      _
    $region19: #{tpu_custom_call.1} parent=1 // pred_check_branch
      %41 = sbr.rel (0) target = $region21
    $region20: #{tpu_custom_call.1} parent=1 // pred_region
      %42 = dma.done [#allocation6], 512
    $region21: #{tpu_custom_call.1} parent=1 // pred_fallthru
      _
    %v43 = vld [vmem:[#allocation2] sm:$0xff]
    %v44 = vld [vmem:[#allocation2 + $0x8] sm:$0xff]
    %v45 = vld [vmem:[#allocation5] sm:$0xff]
    %v46 = vld [vmem:[#allocation5 + $0x8] sm:$0xff]
    %v47 = vld [vmem:[#allocation5 + $0x10] sm:$0xff]
    %v48 = vld [vmem:[#allocation5 + $0x18] sm:$0xff]
    %v49 = vld [vmem:[%s2] sm:$0x1]
    %v51 = vlaneseq
    %v52 = vshrl.u32 %v51, 7
    %v53 = vsub.s32 0, %v52
    %v54 = vrot.slane %v49, %v53
    %vm56 = vcmask 261120
    %v58 = vsel %vm56, %v43, 0
    %v61 = vsel %vm56, %v44, 0
    %63 = vmatprep.subr.mxu0 0.0
    %64 = vmatpush1.msra.mxu0 0.0
    %65 = vmatprep.subr.mxu0 0.0
    %66 = vmatpush1.msra.mxu0 0.0
    %67 = vmatprep.subr.mxu0 0.0
    %68 = vmatpush1.msra.mxu0 0.0
    %69 = vmatprep.subr.mxu0 0.0
    %70 = vmatpush1.msra.mxu0 0.0
    %71 = vmatprep.subr.mxu0 0.0
    %72 = vmatpush1.msra.mxu0 0.0
    %73 = vmatprep.subr.mxu0 0.0
    %74 = vmatpush1.msra.mxu0 0.0
    %75 = vmatprep.subr.mxu0 0.0
    %76 = vmatpush1.msra.mxu0 0.0
    %77 = vmatprep.subr.mxu0 0.0
    %78 = vmatpush1.msra.mxu0 0.0
    %79 = vmatprep.subr.mxu0 0.0
    %80 = vmatpush1.msra.mxu0 0.0
    %81 = vmatprep.subr.mxu0 0.0
    %82 = vmatpush1.msra.mxu0 0.0
    %83 = vmatprep.subr.mxu0 0.0
    %84 = vmatpush1.msra.mxu0 0.0
    %85 = vmatprep.subr.mxu0 0.0
    %86 = vmatpush1.msra.mxu0 0.0
    %87 = vmatprep.subr.mxu0 0.0
    %88 = vmatpush1.msra.mxu0 %v48
    %89 = vmatprep.subr.mxu0 0.0
    %90 = vmatpush1.msra.mxu0 %v47
    %91 = vmatprep.subr.mxu0 0.0
    %92 = vmatpush1.msra.mxu0 %v46
    %93 = vmatprep.subr.mxu0 0.0
    %94 = vmatpush1.msra.mxu0 %v45
    %95 = vmatprep.subr.mxu0 0.0
    %96 = vmatpush2.msra.mxu0 0.0
    %97 = vmatprep.subr.mxu0 0.0
    %98 = vmatpush2.msra.mxu0 0.0
    %99 = vmatprep.subr.mxu0 0.0
    %100 = vmatpush2.msra.mxu0 0.0
    %101 = vmatprep.subr.mxu0 0.0
    %102 = vmatpush2.msra.mxu0 0.0
    %103 = vmatprep.subr.mxu0 0.0
    %104 = vmatpush2.msra.mxu0 0.0
    %105 = vmatprep.subr.mxu0 0.0
    %106 = vmatpush2.msra.mxu0 0.0
    %107 = vmatprep.subr.mxu0 0.0
    %108 = vmatpush2.msra.mxu0 0.0
    %109 = vmatprep.subr.mxu0 0.0
    %110 = vmatpush2.msra.mxu0 0.0
    %111 = vmatprep.subr.mxu0 0.0
    %112 = vmatpush2.msra.mxu0 0.0
    %113 = vmatprep.subr.mxu0 0.0
    %114 = vmatpush2.msra.mxu0 0.0
    %115 = vmatprep.subr.mxu0 0.0
    %116 = vmatpush2.msra.mxu0 0.0
    %117 = vmatprep.subr.mxu0 0.0
    %118 = vmatpush2.msra.mxu0 0.0
    %119 = vmatprep.subr.mxu0 0.0
    %120 = vmatpush2.msra.mxu0 0.0
    %121 = vmatprep.subr.mxu0 0.0
    %122 = vmatpush2.msra.mxu0 0.0
    %123 = vmatprep.subr.mxu0 0.0
    %124 = vmatpush2.msra.mxu0 0.0
    %125 = vmatprep.subr.mxu0 0.0
    %126 = vmatpush2.msra.mxu0 0.0
    %127 = vmatprep.mubr.f32.mxu0 0.0
    %128 = vmatmul.mubr.f32.gmra.mxu0 %v58
    %v129 = vpop.f32.mrf.mxu0
    %v130 = vadd.f32 %v54, %v129
    %v131 = vpop.f32.mrf.mxu0
    %132 = vmatprep.mubr.f32.mxu0 0.0
    %133 = vmatmul.mubr.f32.gmra.mxu0 %v61
    %v134 = vpop.f32.mrf.mxu0
    %v135 = vadd.f32 %v54, %v134
    %v136 = vpop.f32.mrf.mxu0
    %137 = vdwg.mxu0
    %138 = vst [vmem:[#allocation7] sm:$0xff] %v130
    %139 = vst [vmem:[#allocation7 + $0x8] sm:$0xff] %v135
    // Predicated region
    $region22: #{tpu_custom_call.1} parent=1 // pred_check
      _
    $region23: #{tpu_custom_call.1} parent=1 // pred_check_branch
      %141 = sbr.rel (0) target = $region25
    $region24: #{tpu_custom_call.1} parent=1 // pred_region
      %s143 = ssub.s32 256, 256
      %144 = vsyncadd [#allocation4], %s143
      %s145 = sshll.u32 [#allocation7], 4
      %s146 = int_to_ptr.vmem [resolvable:$true] %s145
      %151 = dma.vmem_to_hbm [thread:$0]  %s146, 256, %s3, [#allocation4], 128, 128, 8
    $region25: #{tpu_custom_call.1} parent=1 // pred_fallthru
      _
    // Predicated region
    $region26: #{tpu_custom_call.1} parent=1 // pred_check
      _
    $region27: #{tpu_custom_call.1} parent=1 // pred_check_branch
      %153 = sbr.rel (0) target = $region29
    $region28: #{tpu_custom_call.1} parent=1 // pred_region
      %154 = dma.done [#allocation4], 256
    $region29: #{tpu_custom_call.1} parent=1 // pred_fallthru
      _
    %155 = vsyncpa [#allocation3], 1
    %156 = vsyncpa [#allocation6], 1
    %157 = vsyncpa [#allocation4], 1

</llo_original>
